<compile_context>
chip_gen: v6e
topology: v6e:2x2x1
jax: 0.10.0
libtpu: 0.0.40
codegen_flags: <defaults>
</compile_context>

<pallas_src>
import jax
import jax.numpy as jnp
from jax.experimental import pallas as pl
from jax.experimental.pallas import tpu as pltpu


def _patch_embed_kernel(p_ref, w_ref, b_ref, o_ref):
    # p_ref: (tm, K) bf16 flattened patches (streamed)
    # w_ref: (K, E)  bf16 projection weight (resident)
    # b_ref: (1, E)  f32 bias (resident)
    # o_ref: (tm, E) output embeddings (lane-dense: E multiple of 128)
    acc = jnp.dot(p_ref[...], w_ref[...], preferred_element_type=jnp.float32)
    o_ref[...] = (acc + b_ref[...]).astype(o_ref.dtype)


def patch_embedding(x, weight, bias, patch_size, *, tile_m=1024, out_dtype=None):
    """x: (B, C, H, W) NCHW. weight: (E, C, p, p). bias: (E,).
    Returns (B, n_patches, E).  out_dtype=jnp.bfloat16 halves output HBM bytes
    when the downstream consumer is bf16."""
    B, C, H, W = x.shape
    E = weight.shape[0]
    p = patch_size
    hp, wp = H // p, W // p
    n_patches = hp * wp
    K = C * p * p
    M = B * n_patches

    compute_dtype = jnp.bfloat16
    if out_dtype is None:
        out_dtype = x.dtype

    # --- im2col glue: cast to bf16 FIRST (halves the materialized (M, K) HBM
    # traffic), then extract non-overlapping patches, flatten to (M, K) with K
    # ordered [c, kh, kw] to match Conv2d weight layout.  Under jit this
    # cast+transpose+reshape lowers to a single producer fusion (one HBM write)
    # and there is no pad or slice copy anywhere on the path anymore.
    # TODO(synk): fully fuse patch extraction into the kernel (grid over
    # (b, chunk of hp patch-rows) with (1, C, R*p, W) x-blocks, in-kernel
    # rearrange to (R*wp, K)); kept as bf16 JAX glue because the lane-splitting
    # reshape (W -> (wp, p)) is layout-hazardous on Mosaic.
    xc = x.astype(compute_dtype)
    patches = xc.reshape(B, C, hp, p, wp, p)
    patches = patches.transpose(0, 2, 4, 1, 3, 5)            # (B, hp, wp, C, p, p)
    patches = patches.reshape(M, K)                           # (M, K) bf16

    # Weight/bias prep (constant-folds / fuses under jit; callers that already
    # hold the projection as (K, E) bf16 can skip this and call pallas directly).
    w2d = weight.reshape(E, K).T.astype(compute_dtype)        # (K, E) bf16
    b2d = bias.reshape(1, E).astype(jnp.float32)              # (1, E) f32

    # --- grid selection.
    if M <= tile_m:
        # Whole working set fits VMEM on every generation (incl. v7x 64 MiB):
        # single full-extent block, grid=(1,).  No padding, no slicing.
        tm = M
        grid = (1,)
    else:
        # Large-batch path: big tiles (multiple of 256 recommended) over the
        # UNPADDED array; the ragged last block's reads are bounds-clipped and
        # its output writes past M are masked, so rows stay independent and no
        # garbage lands in adjacent memory.
        tm = tile_m
        grid = (pl.cdiv(M, tm),)

    cost = pl.CostEstimate(
        flops=2 * M * K * E,
        transcendentals=0,
        bytes_accessed=(M * K * patches.dtype.itemsize
                        + K * E * w2d.dtype.itemsize
                        + E * 4
                        + M * E * jnp.dtype(out_dtype).itemsize),
    )

    out = pl.pallas_call(
        _patch_embed_kernel,
        out_shape=jax.ShapeDtypeStruct((M, E), out_dtype),
        grid=grid,
        in_specs=[
            pl.BlockSpec((tm, K), lambda i: (i, 0)),   # patches tile (streamed)
            pl.BlockSpec((K, E), lambda i: (0, 0)),    # weight (resident)
            pl.BlockSpec((1, E), lambda i: (0, 0)),    # bias (resident)
        ],
        out_specs=pl.BlockSpec((tm, E), lambda i: (i, 0)),
        compiler_params=pltpu.CompilerParams(
            dimension_semantics=("parallel",),
            vmem_limit_bytes=32 * 1024 * 1024,
        ),
        cost_estimate=cost,
    )(patches, w2d, b2d)

    return out.reshape(B, n_patches, E)


if __name__ == "__main__":
    # Shapes from the module defaults: img_size=112, patch_size=8, in_chans=3,
    # embed_dim=256 -> n_patches = (112//8)**2 = 196, K = 192, M = 392.
    B, C, HW, P, E = 2, 3, 112, 8, 256

    key = jax.random.PRNGKey(0)
    kx, kw, kb = jax.random.split(key, 3)
    x = jax.random.normal(kx, (B, C, HW, HW), dtype=jnp.float32)
    weight = jax.random.normal(kw, (E, C, P, P), dtype=jnp.float32) * 0.02
    bias = jax.random.normal(kb, (E,), dtype=jnp.float32) * 0.02

    n_patches = (HW // P) ** 2

    # References.
    patches_ref = x.reshape(B, C, HW // P, P, HW // P, P)
    patches_ref = patches_ref.transpose(0, 2, 4, 1, 3, 5).reshape(
        B * n_patches, C * P * P)
    # Ref 1: same bf16 input/weight rounding, f32 accumulate (tight tolerance).
    p_bf = patches_ref.astype(jnp.bfloat16).astype(jnp.float32)
    w_bf = weight.reshape(E, -1).T.astype(jnp.bfloat16).astype(jnp.float32)
    ref_bf = (p_bf @ w_bf + bias).reshape(B, n_patches, E)
    # Ref 2: exact f32 conv-as-matmul (loose tolerance: bf16 operand rounding).
    ref_f32 = (patches_ref @ weight.reshape(E, -1).T + bias).reshape(
        B, n_patches, E)

    # Path 1: shipped size -> single-block (grid=1) path.
    pe_small = jax.jit(lambda x_, w_, b_: patch_embedding(x_, w_, b_, P))
    out = jax.block_until_ready(pe_small(x, weight, bias))
    assert out.shape == (B, n_patches, E), out.shape
    assert jnp.allclose(out, ref_bf, atol=2e-3, rtol=2e-3), \
        float(jnp.max(jnp.abs(out - ref_bf)))
    assert jnp.allclose(out, ref_f32, atol=3e-2, rtol=3e-2), \
        float(jnp.max(jnp.abs(out - ref_f32)))

    # Path 2: force the tiled path (grid=cdiv(392,128)=4, ragged last block of
    # 8 rows) to exercise unpadded-M read-clipping / write-masking behavior.
    pe_tiled = jax.jit(lambda x_, w_, b_: patch_embedding(x_, w_, b_, P, tile_m=128))
    out_t = jax.block_until_ready(pe_tiled(x, weight, bias))
    assert out_t.shape == (B, n_patches, E), out_t.shape
    assert jnp.allclose(out_t, ref_bf, atol=2e-3, rtol=2e-3), \
        float(jnp.max(jnp.abs(out_t - ref_bf)))
    assert jnp.allclose(out_t, ref_f32, atol=3e-2, rtol=3e-2), \
        float(jnp.max(jnp.abs(out_t - ref_f32)))

    print("KERNEL_OK")
</pallas_src>

<mosaic_0001>
module attributes {stable_mosaic.version = 11 : i64} {
  func.func @_patch_embed_kernel(%arg0: i32, %arg1: memref<392x192xbf16, #tpu.memory_space<vmem>>, %arg2: memref<192x256xbf16, #tpu.memory_space<vmem>>, %arg3: memref<1x256xf32, #tpu.memory_space<vmem>>, %arg4: memref<392x256xf32, #tpu.memory_space<vmem>>) attributes {dimension_semantics = [#tpu.dimension_semantics<parallel>], iteration_bounds = array<i64: 1>, scalar_prefetch = 0 : i64, scratch_operands = 0 : i64, tpu.core_type = #tpu.core_type<tc>, window_params = [{transform_indices = @transform_0, window_bounds = array<i64: 392, 192>}, {pipeline_mode = #tpu.pipeline_mode<synchronous>, transform_indices = @transform_1, window_bounds = array<i64: 192, 256>}, {pipeline_mode = #tpu.pipeline_mode<synchronous>, transform_indices = @transform_2, window_bounds = array<i64: 1, 256>}, {transform_indices = @transform_3, window_bounds = array<i64: 392, 256>}]} {
    %c0 = arith.constant 0 : index
    %c0_0 = arith.constant 0 : index
    %0 = vector.load %arg1[%c0, %c0_0] : memref<392x192xbf16, #tpu.memory_space<vmem>>, vector<392x192xbf16>
    %c0_1 = arith.constant 0 : index
    %c0_2 = arith.constant 0 : index
    %1 = vector.load %arg2[%c0_1, %c0_2] : memref<192x256xbf16, #tpu.memory_space<vmem>>, vector<192x256xbf16>
    %cst = arith.constant dense<0.000000e+00> : vector<392x256xf32>
    %2 = tpu.matmul %0, %1, %cst {dimension_numbers = #tpu.dot_dimension_numbers<[1], [0], [0], [1], [0, 0, 1, 1], [], []>} : vector<392x192xbf16>, vector<192x256xbf16>, vector<392x256xf32> -> vector<392x256xf32>
    %c0_3 = arith.constant 0 : index
    %c0_4 = arith.constant 0 : index
    %3 = vector.load %arg3[%c0_3, %c0_4] : memref<1x256xf32, #tpu.memory_space<vmem>>, vector<1x256xf32>
    %4 = vector.broadcast %3 : vector<1x256xf32> to vector<392x256xf32>
    %5 = arith.addf %2, %4 : vector<392x256xf32>
    %c0_5 = arith.constant 0 : index
    %c0_6 = arith.constant 0 : index
    %6 = vector.load %arg4[%c0_5, %c0_6] : memref<392x256xf32, #tpu.memory_space<vmem>>, vector<392x256xf32>
    tpu.vector_store %arg4[%c0_5, %c0_6], %5 {strides = array<i32>} : memref<392x256xf32, #tpu.memory_space<vmem>>, vector<392x256xf32>,
    return
  }
  func.func @transform_0(%arg0: i32) -> (i32, i32) {
    %c0_i32 = arith.constant 0 : i32
    %c0_i32_0 = arith.constant 0 : i32
    return %arg0, %c0_i32 : i32, i32
  }
  func.func @transform_1(%arg0: i32) -> (i32, i32) {
    %c0_i32 = arith.constant 0 : i32
    %c0_i32_0 = arith.constant 0 : i32
    %c0_i32_1 = arith.constant 0 : i32
    return %c0_i32, %c0_i32_0 : i32, i32
  }
  func.func @transform_2(%arg0: i32) -> (i32, i32) {
    %c0_i32 = arith.constant 0 : i32
    %c0_i32_0 = arith.constant 0 : i32
    %c0_i32_1 = arith.constant 0 : i32
    return %c0_i32, %c0_i32_0 : i32, i32
  }
  func.func @transform_3(%arg0: i32) -> (i32, i32) {
    %c0_i32 = arith.constant 0 : i32
    %c0_i32_0 = arith.constant 0 : i32
    return %arg0, %c0_i32 : i32, i32
  }
}

</mosaic_0001>

<llo_original>
// kernel: _lambda_.1
$region0: #{_lambda_.1}
  #allocation0 [shape = 'u32[]', space=smem, size = 0x4, offset = 0x4, fixed_abs, tag = 'smem constant byte address 0x4 - core index']
  #allocation1 [shape = 'u32[144,128]{1,0:T(1,128)}', space=vmem, size = 0x12000, scoped, tag = 'internal scratch']
  %s0 = inlined_call_operand.vmem [shape: bf16[392,192], index: 0, kind: input, shape index: {}]
  %s1 = inlined_call_operand.vmem [shape: bf16[192,256], index: 1, kind: input, shape index: {}]
  %s2 = inlined_call_operand.vmem [shape: f32[1,256], index: 2, kind: input, shape index: {}]
  %s3 = inlined_call_operand.vmem [shape: f32[392,256], index: 3, kind: output, shape index: {}]
  %s4 = sld [smem:[#allocation0]]
  $region22: #{_lambda_.1} parent=0
    _
  %s6 = ssub.s32 1, %s4
  %s7 = scalar_select 0, %s6, %s4
  // Predicated region
  $region2: #{_lambda_.1} parent=0 // pred_check
    _
  $region3: #{_lambda_.1} parent=0 // pred_check_branch
    %9 = sbr.rel (0) target = $region5
  $region4: #{_lambda_.1} parent=0 // pred_region
    _
  $region5: #{_lambda_.1} parent=0 // pred_fallthru
    _
  // Predicated region
  $region6: #{_lambda_.1} parent=0 // pred_check
    _
  $region7: #{_lambda_.1} parent=0 // pred_check_branch
    %11 = sbr.rel (0) target = $region9
  $region8: #{_lambda_.1} parent=0 // pred_region
    _
  $region9: #{_lambda_.1} parent=0 // pred_fallthru
    _
  // Predicated region
  $region10: #{_lambda_.1} parent=0 // pred_check
    _
  $region11: #{_lambda_.1} parent=0 // pred_check_branch
    %13 = sbr.rel (0) target = $region13
  $region12: #{_lambda_.1} parent=0 // pred_region
    _
  $region13: #{_lambda_.1} parent=0 // pred_fallthru
    _
  %v15 = vld [vmem:[%s0] sm:$0xff]
  %v16 = vld [vmem:[%s0 + $0x8] sm:$0xff]
  %v17 = vld [vmem:[%s0 + $0x10] sm:$0xff]
  %v18 = vld [vmem:[%s0 + $0x18] sm:$0xff]
  %v19 = vld [vmem:[%s0 + $0x20] sm:$0xff]
  %v20 = vld [vmem:[%s0 + $0x28] sm:$0xff]
  %v21 = vld [vmem:[%s0 + $0x30] sm:$0xff]
  %v22 = vld [vmem:[%s0 + $0x38] sm:$0xff]
  %v23 = vld [vmem:[%s0 + $0x40] sm:$0xff]
  %v24 = vld [vmem:[%s0 + $0x48] sm:$0xff]
  %v25 = vld [vmem:[%s0 + $0x50] sm:$0xff]
  %v26 = vld [vmem:[%s0 + $0x58] sm:$0xff]
  %v27 = vld [vmem:[%s0 + $0x60] sm:$0xff]
  %v28 = vld [vmem:[%s0 + $0x68] sm:$0xff]
  %v29 = vld [vmem:[%s0 + $0x70] sm:$0xff]
  %v30 = vld [vmem:[%s0 + $0x78] sm:$0xff]
  %v31 = vld [vmem:[%s0 + $0x80] sm:$0xff]
  %v32 = vld [vmem:[%s0 + $0x88] sm:$0xff]
  %v33 = vld [vmem:[%s0 + $0x90] sm:$0xff]
  %v34 = vld [vmem:[%s0 + $0x98] sm:$0xff]
  %v35 = vld [vmem:[%s0 + $0xa0] sm:$0xff]
  %v36 = vld [vmem:[%s0 + $0xa8] sm:$0xff]
  %v37 = vld [vmem:[%s0 + $0xb0] sm:$0xff]
  %v38 = vld [vmem:[%s0 + $0xb8] sm:$0xff]
  %v39 = vld [vmem:[%s0 + $0xc0] sm:$0xff]
  %v40 = vld [vmem:[%s0 + $0xc8] sm:$0xff]
  %v41 = vld [vmem:[%s0 + $0xd0] sm:$0xff]
  %v42 = vld [vmem:[%s0 + $0xd8] sm:$0xff]
  %v43 = vld [vmem:[%s0 + $0xe0] sm:$0xff]
  %v44 = vld [vmem:[%s0 + $0xe8] sm:$0xff]
  %v45 = vld [vmem:[%s0 + $0xf0] sm:$0xff]
  %v46 = vld [vmem:[%s0 + $0xf8] sm:$0xff]
  %v47 = vld [vmem:[%s0 + $0x100] sm:$0xff]
  %v48 = vld [vmem:[%s0 + $0x108] sm:$0xff]
  %v49 = vld [vmem:[%s0 + $0x110] sm:$0xff]
  %v50 = vld [vmem:[%s0 + $0x118] sm:$0xff]
  %v51 = vld [vmem:[%s0 + $0x120] sm:$0xff]
  %v52 = vld [vmem:[%s0 + $0x128] sm:$0xff]
  %v53 = vld [vmem:[%s0 + $0x130] sm:$0xff]
  %v54 = vld [vmem:[%s0 + $0x138] sm:$0xff]
  %v55 = vld [vmem:[%s0 + $0x140] sm:$0xff]
  %v56 = vld [vmem:[%s0 + $0x148] sm:$0xff]
  %v57 = vld [vmem:[%s0 + $0x150] sm:$0xff]
  %v58 = vld [vmem:[%s0 + $0x158] sm:$0xff]
  %v59 = vld [vmem:[%s0 + $0x160] sm:$0xff]
  %v60 = vld [vmem:[%s0 + $0x168] sm:$0xff]
  %v61 = vld [vmem:[%s0 + $0x170] sm:$0xff]
  %v62 = vld [vmem:[%s0 + $0x178] sm:$0xff]
  %v63 = vld [vmem:[%s0 + $0x180] sm:$0xff]
  %v64 = vld [vmem:[%s1] sm:$0xff]
  %v65 = vld [vmem:[%s1 + $0x8] sm:$0xff]
  %v66 = vld [vmem:[%s1 + $0x10] sm:$0xff]
  %v67 = vld [vmem:[%s1 + $0x18] sm:$0xff]
  %v68 = vld [vmem:[%s1 + $0x20] sm:$0xff]
  %v69 = vld [vmem:[%s1 + $0x28] sm:$0xff]
  %v70 = vld [vmem:[%s1 + $0x30] sm:$0xff]
  %v71 = vld [vmem:[%s1 + $0x38] sm:$0xff]
  %v72 = vld [vmem:[%s1 + $0x40] sm:$0xff]
  %v73 = vld [vmem:[%s1 + $0x48] sm:$0xff]
  %v74 = vld [vmem:[%s1 + $0x50] sm:$0xff]
  %v75 = vld [vmem:[%s1 + $0x58] sm:$0xff]
  %v76 = vld [vmem:[%s1 + $0x60] sm:$0xff]
  %v77 = vld [vmem:[%s1 + $0x68] sm:$0xff]
  %v78 = vld [vmem:[%s1 + $0x70] sm:$0xff]
  %v79 = vld [vmem:[%s1 + $0x78] sm:$0xff]
  %v80 = vld [vmem:[%s1 + $0x80] sm:$0xff]
  %v81 = vld [vmem:[%s1 + $0x88] sm:$0xff]
  %v82 = vld [vmem:[%s1 + $0x90] sm:$0xff]
  %v83 = vld [vmem:[%s1 + $0x98] sm:$0xff]
  %v84 = vld [vmem:[%s1 + $0xa0] sm:$0xff]
  %v85 = vld [vmem:[%s1 + $0xa8] sm:$0xff]
  %v86 = vld [vmem:[%s1 + $0xb0] sm:$0xff]
  %v87 = vld [vmem:[%s1 + $0xb8] sm:$0xff]
  %v88 = vld [vmem:[%s2] sm:$0x3]
  %v90 = vlaneseq
  %v91 = vshrl.u32 %v90, 7
  %v92 = vsub.s32 0, %v91
  %v93 = vrot.slane %v88, %v92
  %v94 = vlaneseq
  %v95 = vshrl.u32 %v94, 7
  %v96 = vsub.s32 1, %v95
  %v97 = vrot.slane %v88, %v96
  %v149 = vunpack.c.l.b16 %v15
  %v150 = vunpack.c.h.b16 %v15
  %v151 = vunpack.c.l.b16 %v16
  %v152 = vunpack.c.h.b16 %v16
  %v153 = vunpack.c.l.b16 %v17
  %v154 = vunpack.c.h.b16 %v17
  %v155 = vunpack.c.l.b16 %v18
  %v156 = vunpack.c.h.b16 %v18
  %v157 = vunpack.c.l.b16 %v19
  %v158 = vunpack.c.h.b16 %v19
  %v159 = vunpack.c.l.b16 %v20
  %v160 = vunpack.c.h.b16 %v20
  %v161 = vunpack.c.l.b16 %v21
  %v162 = vunpack.c.h.b16 %v21
  %v163 = vunpack.c.l.b16 %v22
  %v164 = vunpack.c.h.b16 %v22
  %v165 = vunpack.c.l.b16 %v23
  %v166 = vunpack.c.h.b16 %v23
  %v167 = vunpack.c.l.b16 %v24
  %v168 = vunpack.c.h.b16 %v24
  %v169 = vunpack.c.l.b16 %v25
  %v170 = vunpack.c.h.b16 %v25
  %v171 = vunpack.c.l.b16 %v26
  %v172 = vunpack.c.h.b16 %v26
  %v173 = vunpack.c.l.b16 %v27
  %v174 = vunpack.c.h.b16 %v27
  %v175 = vunpack.c.l.b16 %v28
  %v176 = vunpack.c.h.b16 %v28
  %v177 = vunpack.c.l.b16 %v29
  %v178 = vunpack.c.h.b16 %v29
  %v179 = vunpack.c.l.b16 %v30
  %v180 = vunpack.c.h.b16 %v30
  %v181 = vunpack.c.l.b16 %v31
  %v182 = vunpack.c.h.b16 %v31
  %v183 = vunpack.c.l.b16 %v32
  %v184 = vunpack.c.h.b16 %v32
  %v185 = vunpack.c.l.b16 %v33
  %v186 = vunpack.c.h.b16 %v33
  %v187 = vunpack.c.l.b16 %v34
  %v188 = vunpack.c.h.b16 %v34
  %v189 = vunpack.c.l.b16 %v35
  %v190 = vunpack.c.h.b16 %v35
  %v191 = vunpack.c.l.b16 %v36
  %v192 = vunpack.c.h.b16 %v36
  %v193 = vunpack.c.l.b16 %v37
  %v194 = vunpack.c.h.b16 %v37
  %v195 = vunpack.c.l.b16 %v38
  %v196 = vunpack.c.h.b16 %v38
  %v197 = vunpack.c.l.b16 %v39
  %v198 = vunpack.c.h.b16 %v39
  %v199 = vunpack.c.l.b16 %v40
  %v200 = vunpack.c.h.b16 %v40
  %v201 = vunpack.c.l.b16 %v41
  %v202 = vunpack.c.h.b16 %v41
  %v203 = vunpack.c.l.b16 %v42
  %v204 = vunpack.c.h.b16 %v42
  %v205 = vunpack.c.l.b16 %v43
  %v206 = vunpack.c.h.b16 %v43
  %v207 = vunpack.c.l.b16 %v44
  %v208 = vunpack.c.h.b16 %v44
  %v209 = vunpack.c.l.b16 %v45
  %v210 = vunpack.c.h.b16 %v45
  %v211 = vunpack.c.l.b16 %v46
  %v212 = vunpack.c.h.b16 %v46
  %v213 = vunpack.c.l.b16 %v47
  %v214 = vunpack.c.h.b16 %v47
  %v215 = vunpack.c.l.b16 %v48
  %v216 = vunpack.c.h.b16 %v48
  %v217 = vunpack.c.l.b16 %v49
  %v218 = vunpack.c.h.b16 %v49
  %v219 = vunpack.c.l.b16 %v50
  %v220 = vunpack.c.h.b16 %v50
  %v221 = vunpack.c.l.b16 %v51
  %v222 = vunpack.c.h.b16 %v51
  %v223 = vunpack.c.l.b16 %v52
  %v224 = vunpack.c.h.b16 %v52
  %v225 = vunpack.c.l.b16 %v53
  %v226 = vunpack.c.h.b16 %v53
  %v227 = vunpack.c.l.b16 %v54
  %v228 = vunpack.c.h.b16 %v54
  %v229 = vunpack.c.l.b16 %v55
  %v230 = vunpack.c.h.b16 %v55
  %v231 = vunpack.c.l.b16 %v56
  %v232 = vunpack.c.h.b16 %v56
  %v233 = vunpack.c.l.b16 %v57
  %v234 = vunpack.c.h.b16 %v57
  %v235 = vunpack.c.l.b16 %v58
  %v236 = vunpack.c.h.b16 %v58
  %v237 = vunpack.c.l.b16 %v59
  %v238 = vunpack.c.h.b16 %v59
  %v239 = vunpack.c.l.b16 %v60
  %v240 = vunpack.c.h.b16 %v60
  %v241 = vunpack.c.l.b16 %v61
  %v242 = vunpack.c.h.b16 %v61
  %v243 = vunpack.c.l.b16 %v62
  %v244 = vunpack.c.h.b16 %v62
  %v245 = vunpack.c.l.b16 %v63
  %v246 = vunpack.c.h.b16 %v63
  %v247 = vpack.c.b16 %v151, %v149
  %v248 = vpack.c.b16 %v152, %v150
  %v249 = vpack.c.b16 %v155, %v153
  %v250 = vpack.c.b16 %v156, %v154
  %v251 = vpack.c.b16 %v159, %v157
  %v252 = vpack.c.b16 %v160, %v158
  %v253 = vpack.c.b16 %v163, %v161
  %v254 = vpack.c.b16 %v164, %v162
  %v255 = vpack.c.b16 %v167, %v165
  %v256 = vpack.c.b16 %v168, %v166
  %v257 = vpack.c.b16 %v171, %v169
  %v258 = vpack.c.b16 %v172, %v170
  %v259 = vpack.c.b16 %v175, %v173
  %v260 = vpack.c.b16 %v176, %v174
  %v261 = vpack.c.b16 %v179, %v177
  %v262 = vpack.c.b16 %v180, %v178
  %v263 = vpack.c.b16 %v183, %v181
  %v264 = vpack.c.b16 %v184, %v182
  %v265 = vpack.c.b16 %v187, %v185
  %v266 = vpack.c.b16 %v188, %v186
  %v267 = vpack.c.b16 %v191, %v189
  %v268 = vpack.c.b16 %v192, %v190
  %v269 = vpack.c.b16 %v195, %v193
  %v270 = vpack.c.b16 %v196, %v194
  %v271 = vpack.c.b16 %v199, %v197
  %v272 = vpack.c.b16 %v200, %v198
  %v273 = vpack.c.b16 %v203, %v201
  %v274 = vpack.c.b16 %v204, %v202
  %v275 = vpack.c.b16 %v207, %v205
  %v276 = vpack.c.b16 %v208, %v206
  %v277 = vpack.c.b16 %v211, %v209
  %v278 = vpack.c.b16 %v212, %v210
  %v279 = vpack.c.b16 %v215, %v213
  %v280 = vpack.c.b16 %v216, %v214
  %v281 = vpack.c.b16 %v219, %v217
  %v282 = vpack.c.b16 %v220, %v218
  %v283 = vpack.c.b16 %v223, %v221
  %v284 = vpack.c.b16 %v224, %v222
  %v285 = vpack.c.b16 %v227, %v225
  %v286 = vpack.c.b16 %v228, %v226
  %v287 = vpack.c.b16 %v231, %v229
  %v288 = vpack.c.b16 %v232, %v230
  %v289 = vpack.c.b16 %v235, %v233
  %v290 = vpack.c.b16 %v236, %v234
  %v291 = vpack.c.b16 %v239, %v237
  %v292 = vpack.c.b16 %v240, %v238
  %v293 = vpack.c.b16 %v243, %v241
  %v294 = vpack.c.b16 %v244, %v242
  %v295 = vpack.c.b16 %v245, %v245
  %v296 = vpack.c.b16 %v246, %v246
  %v346 = vunpack.c.l.b16 %v64
  %v347 = vunpack.c.h.b16 %v64
  %v348 = vunpack.c.l.b16 %v65
  %v349 = vunpack.c.h.b16 %v65
  %v350 = vunpack.c.l.b16 %v66
  %v351 = vunpack.c.h.b16 %v66
  %v352 = vunpack.c.l.b16 %v67
  %v353 = vunpack.c.h.b16 %v67
  %v354 = vunpack.c.l.b16 %v68
  %v355 = vunpack.c.h.b16 %v68
  %v356 = vunpack.c.l.b16 %v69
  %v357 = vunpack.c.h.b16 %v69
  %v358 = vunpack.c.l.b16 %v70
  %v359 = vunpack.c.h.b16 %v70
  %v360 = vunpack.c.l.b16 %v71
  %v361 = vunpack.c.h.b16 %v71
  %v362 = vunpack.c.l.b16 %v72
  %v363 = vunpack.c.h.b16 %v72
  %v364 = vunpack.c.l.b16 %v73
  %v365 = vunpack.c.h.b16 %v73
  %v366 = vunpack.c.l.b16 %v74
  %v367 = vunpack.c.h.b16 %v74
  %v368 = vunpack.c.l.b16 %v75
  %v369 = vunpack.c.h.b16 %v75
  %v370 = vunpack.c.l.b16 %v76
  %v371 = vunpack.c.h.b16 %v76
  %v372 = vunpack.c.l.b16 %v77
  %v373 = vunpack.c.h.b16 %v77
  %v374 = vunpack.c.l.b16 %v78
  %v375 = vunpack.c.h.b16 %v78
  %v376 = vunpack.c.l.b16 %v79
  %v377 = vunpack.c.h.b16 %v79
  %v378 = vunpack.c.l.b16 %v80
  %v379 = vunpack.c.h.b16 %v80
  %v380 = vunpack.c.l.b16 %v81
  %v381 = vunpack.c.h.b16 %v81
  %v382 = vunpack.c.l.b16 %v82
  %v383 = vunpack.c.h.b16 %v82
  %v384 = vunpack.c.l.b16 %v83
  %v385 = vunpack.c.h.b16 %v83
  %v386 = vunpack.c.l.b16 %v84
  %v387 = vunpack.c.h.b16 %v84
  %v388 = vunpack.c.l.b16 %v85
  %v389 = vunpack.c.h.b16 %v85
  %v390 = vunpack.c.l.b16 %v86
  %v391 = vunpack.c.h.b16 %v86
  %v392 = vunpack.c.l.b16 %v87
  %v393 = vunpack.c.h.b16 %v87
  %v394 = vpack.c.b16 %v348, %v346
  %v395 = vpack.c.b16 %v349, %v347
  %v396 = vpack.c.b16 %v352, %v350
  %v397 = vpack.c.b16 %v353, %v351
  %v398 = vpack.c.b16 %v356, %v354
  %v399 = vpack.c.b16 %v357, %v355
  %v400 = vpack.c.b16 %v360, %v358
  %v401 = vpack.c.b16 %v361, %v359
  %v402 = vpack.c.b16 %v364, %v362
  %v403 = vpack.c.b16 %v365, %v363
  %v404 = vpack.c.b16 %v368, %v366
  %v405 = vpack.c.b16 %v369, %v367
  %v406 = vpack.c.b16 %v372, %v370
  %v407 = vpack.c.b16 %v373, %v371
  %v408 = vpack.c.b16 %v376, %v374
  %v409 = vpack.c.b16 %v377, %v375
  %v410 = vpack.c.b16 %v380, %v378
  %v411 = vpack.c.b16 %v381, %v379
  %v412 = vpack.c.b16 %v384, %v382
  %v413 = vpack.c.b16 %v385, %v383
  %v414 = vpack.c.b16 %v388, %v386
  %v415 = vpack.c.b16 %v389, %v387
  %v416 = vpack.c.b16 %v392, %v390
  %v417 = vpack.c.b16 %v393, %v391
  %vm442 = vcmask 523264
  %v444 = vsel %vm442, %v248, 0
  %v447 = vsel %vm442, %v250, 0
  %v450 = vsel %vm442, %v252, 0
  %v453 = vsel %vm442, %v254, 0
  %v456 = vsel %vm442, %v256, 0
  %v459 = vsel %vm442, %v258, 0
  %v462 = vsel %vm442, %v260, 0
  %v465 = vsel %vm442, %v262, 0
  %v468 = vsel %vm442, %v264, 0
  %v471 = vsel %vm442, %v266, 0
  %v474 = vsel %vm442, %v268, 0
  %v477 = vsel %vm442, %v270, 0
  %v480 = vsel %vm442, %v272, 0
  %v483 = vsel %vm442, %v274, 0
  %v486 = vsel %vm442, %v276, 0
  %v489 = vsel %vm442, %v278, 0
  %v492 = vsel %vm442, %v280, 0
  %v495 = vsel %vm442, %v282, 0
  %v498 = vsel %vm442, %v284, 0
  %v501 = vsel %vm442, %v286, 0
  %v504 = vsel %vm442, %v288, 0
  %v507 = vsel %vm442, %v290, 0
  %v510 = vsel %vm442, %v292, 0
  %v513 = vsel %vm442, %v294, 0
  %v516 = vsel %vm442, %v296, 0
  %518 = vmatprep.subr.bf16.mxu0 %v409
  %519 = vmatpush1.bf16.msra.mxu0 %v408
  %520 = vmatprep.subr.bf16.mxu0 %v407
  %521 = vmatpush1.bf16.msra.mxu0 %v406
  %522 = vmatprep.subr.bf16.mxu0 %v405
  %523 = vmatpush1.bf16.msra.mxu0 %v404
  %524 = vmatprep.subr.bf16.mxu0 %v403
  %525 = vmatpush1.bf16.msra.mxu0 %v402
  %526 = vmatprep.subr.bf16.mxu0 %v401
  %527 = vmatpush1.bf16.msra.mxu0 %v400
  %528 = vmatprep.subr.bf16.mxu0 %v399
  %529 = vmatpush1.bf16.msra.mxu0 %v398
  %530 = vmatprep.subr.bf16.mxu0 %v397
  %531 = vmatpush1.bf16.msra.mxu0 %v396
  %532 = vmatprep.subr.bf16.mxu0 %v395
  %533 = vmatpush1.bf16.msra.mxu0 %v394
  %534 = vmatprep.subr.bf16.mxu0 0
  %535 = vmatpush2.bf16.msra.mxu0 0
  %536 = vmatprep.subr.bf16.mxu0 0
  %537 = vmatpush2.bf16.msra.mxu0 0
  %538 = vmatprep.subr.bf16.mxu0 0
  %539 = vmatpush2.bf16.msra.mxu0 0
  %540 = vmatprep.subr.bf16.mxu0 0
  %541 = vmatpush2.bf16.msra.mxu0 0
  %542 = vmatprep.subr.bf16.mxu0 %v417
  %543 = vmatpush2.bf16.msra.mxu0 %v416
  %544 = vmatprep.subr.bf16.mxu0 %v415
  %545 = vmatpush2.bf16.msra.mxu0 %v414
  %546 = vmatprep.subr.bf16.mxu0 %v413
  %547 = vmatpush2.bf16.msra.mxu0 %v412
  %548 = vmatprep.subr.bf16.mxu0 %v411
  %549 = vmatpush2.bf16.msra.mxu0 %v410
  %550 = vmatprep.mubr.bf16.mxu0 %v444
  %551 = vmatmul.mubr.bf16.gmra.mxu0 %v247
  %v552 = vpop.f32.mrf.mxu0
  %v553 = vadd.f32 %v93, %v552
  %v554 = vpop.f32.mrf.mxu0
  %v555 = vadd.f32 %v97, %v554
  %v556 = vpop.f32.mrf.mxu0
  %v557 = vadd.f32 %v93, %v556
  %v558 = vpop.f32.mrf.mxu0
  %v559 = vadd.f32 %v97, %v558
  %560 = vmatprep.mubr.bf16.mxu0 %v447
  %561 = vmatmul.mubr.bf16.gmra.mxu0 %v249
  %v562 = vpop.f32.mrf.mxu0
  %v563 = vadd.f32 %v93, %v562
  %v564 = vpop.f32.mrf.mxu0
  %v565 = vadd.f32 %v97, %v564
  %v566 = vpop.f32.mrf.mxu0
  %v567 = vadd.f32 %v93, %v566
  %v568 = vpop.f32.mrf.mxu0
  %v569 = vadd.f32 %v97, %v568
  %570 = vmatprep.mubr.bf16.mxu0 %v450
  %571 = vmatmul.mubr.bf16.gmra.mxu0 %v251
  %v572 = vpop.f32.mrf.mxu0
  %v573 = vadd.f32 %v93, %v572
  %v574 = vpop.f32.mrf.mxu0
  %v575 = vadd.f32 %v97, %v574
  %v576 = vpop.f32.mrf.mxu0
  %v577 = vadd.f32 %v93, %v576
  %v578 = vpop.f32.mrf.mxu0
  %v579 = vadd.f32 %v97, %v578
  %580 = vmatprep.mubr.bf16.mxu0 %v453
  %581 = vmatmul.mubr.bf16.gmra.mxu0 %v253
  %v582 = vpop.f32.mrf.mxu0
  %v583 = vadd.f32 %v93, %v582
  %v584 = vpop.f32.mrf.mxu0
  %v585 = vadd.f32 %v97, %v584
  %v586 = vpop.f32.mrf.mxu0
  %v587 = vadd.f32 %v93, %v586
  %v588 = vpop.f32.mrf.mxu0
  %v589 = vadd.f32 %v97, %v588
  %590 = vmatprep.mubr.bf16.mxu0 %v456
  %591 = vmatmul.mubr.bf16.gmra.mxu0 %v255
  %v592 = vpop.f32.mrf.mxu0
  %v593 = vadd.f32 %v93, %v592
  %v594 = vpop.f32.mrf.mxu0
  %v595 = vadd.f32 %v97, %v594
  %v596 = vpop.f32.mrf.mxu0
  %v597 = vadd.f32 %v93, %v596
  %v598 = vpop.f32.mrf.mxu0
  %v599 = vadd.f32 %v97, %v598
  %600 = vmatprep.mubr.bf16.mxu0 %v459
  %601 = vmatmul.mubr.bf16.gmra.mxu0 %v257
  %v602 = vpop.f32.mrf.mxu0
  %v603 = vadd.f32 %v93, %v602
  %v604 = vpop.f32.mrf.mxu0
  %v605 = vadd.f32 %v97, %v604
  %v606 = vpop.f32.mrf.mxu0
  %v607 = vadd.f32 %v93, %v606
  %v608 = vpop.f32.mrf.mxu0
  %v609 = vadd.f32 %v97, %v608
  %610 = vmatprep.mubr.bf16.mxu0 %v462
  %611 = vmatmul.mubr.bf16.gmra.mxu0 %v259
  %v612 = vpop.f32.mrf.mxu0
  %v613 = vadd.f32 %v93, %v612
  %v614 = vpop.f32.mrf.mxu0
  %v615 = vadd.f32 %v97, %v614
  %v616 = vpop.f32.mrf.mxu0
  %v617 = vadd.f32 %v93, %v616
  %v618 = vpop.f32.mrf.mxu0
  %v619 = vadd.f32 %v97, %v618
  %620 = vmatprep.mubr.bf16.mxu0 %v465
  %621 = vmatmul.mubr.bf16.gmra.mxu0 %v261
  %v622 = vpop.f32.mrf.mxu0
  %v623 = vadd.f32 %v93, %v622
  %v624 = vpop.f32.mrf.mxu0
  %v625 = vadd.f32 %v97, %v624
  %v626 = vpop.f32.mrf.mxu0
  %v627 = vadd.f32 %v93, %v626
  %v628 = vpop.f32.mrf.mxu0
  %v629 = vadd.f32 %v97, %v628
  %630 = vmatprep.mubr.bf16.mxu0 %v468
  %631 = vmatmul.mubr.bf16.gmra.mxu0 %v263
  %v632 = vpop.f32.mrf.mxu0
  %v633 = vadd.f32 %v93, %v632
  %v634 = vpop.f32.mrf.mxu0
  %v635 = vadd.f32 %v97, %v634
  %v636 = vpop.f32.mrf.mxu0
  %v637 = vadd.f32 %v93, %v636
  %v638 = vpop.f32.mrf.mxu0
  %v639 = vadd.f32 %v97, %v638
  %640 = vmatprep.mubr.bf16.mxu0 %v471
  %641 = vmatmul.mubr.bf16.gmra.mxu0 %v265
  %v642 = vpop.f32.mrf.mxu0
  %v643 = vadd.f32 %v93, %v642
  %v644 = vpop.f32.mrf.mxu0
  %v645 = vadd.f32 %v97, %v644
  %v646 = vpop.f32.mrf.mxu0
  %v647 = vadd.f32 %v93, %v646
  %v648 = vpop.f32.mrf.mxu0
  %v649 = vadd.f32 %v97, %v648
  %650 = vmatprep.mubr.bf16.mxu0 %v474
  %651 = vmatmul.mubr.bf16.gmra.mxu0 %v267
  %v652 = vpop.f32.mrf.mxu0
  %v653 = vadd.f32 %v93, %v652
  %v654 = vpop.f32.mrf.mxu0
  %v655 = vadd.f32 %v97, %v654
  %v656 = vpop.f32.mrf.mxu0
  %v657 = vadd.f32 %v93, %v656
  %v658 = vpop.f32.mrf.mxu0
  %v659 = vadd.f32 %v97, %v658
  %660 = vmatprep.mubr.bf16.mxu0 %v477
  %661 = vmatmul.mubr.bf16.gmra.mxu0 %v269
  %v662 = vpop.f32.mrf.mxu0
  %v663 = vadd.f32 %v93, %v662
  %v664 = vpop.f32.mrf.mxu0
  %v665 = vadd.f32 %v97, %v664
  %v666 = vpop.f32.mrf.mxu0
  %v667 = vadd.f32 %v93, %v666
  %v668 = vpop.f32.mrf.mxu0
  %v669 = vadd.f32 %v97, %v668
  %670 = vmatprep.mubr.bf16.mxu0 %v480
  %671 = vmatmul.mubr.bf16.gmra.mxu0 %v271
  %v672 = vpop.f32.mrf.mxu0
  %v673 = vadd.f32 %v93, %v672
  %v674 = vpop.f32.mrf.mxu0
  %v675 = vadd.f32 %v97, %v674
  %v676 = vpop.f32.mrf.mxu0
  %v677 = vadd.f32 %v93, %v676
  %v678 = vpop.f32.mrf.mxu0
  %v679 = vadd.f32 %v97, %v678
  %680 = vmatprep.mubr.bf16.mxu0 %v483
  %681 = vmatmul.mubr.bf16.gmra.mxu0 %v273
  %v682 = vpop.f32.mrf.mxu0
  %v683 = vadd.f32 %v93, %v682
  %v684 = vpop.f32.mrf.mxu0
  %v685 = vadd.f32 %v97, %v684
  %v686 = vpop.f32.mrf.mxu0
  %v687 = vadd.f32 %v93, %v686
  %v688 = vpop.f32.mrf.mxu0
  %v689 = vadd.f32 %v97, %v688
  %690 = vmatprep.mubr.bf16.mxu0 %v486
  %691 = vmatmul.mubr.bf16.gmra.mxu0 %v275
  %v692 = vpop.f32.mrf.mxu0
  %v693 = vadd.f32 %v93, %v692
  %v694 = vpop.f32.mrf.mxu0
  %v695 = vadd.f32 %v97, %v694
  %v696 = vpop.f32.mrf.mxu0
  %v697 = vadd.f32 %v93, %v696
  %v698 = vpop.f32.mrf.mxu0
  %v699 = vadd.f32 %v97, %v698
  %700 = vmatprep.mubr.bf16.mxu0 %v489
  %701 = vmatmul.mubr.bf16.gmra.mxu0 %v277
  %v702 = vpop.f32.mrf.mxu0
  %v703 = vadd.f32 %v93, %v702
  %v704 = vpop.f32.mrf.mxu0
  %v705 = vadd.f32 %v97, %v704
  %v706 = vpop.f32.mrf.mxu0
  %v707 = vadd.f32 %v93, %v706
  %v708 = vpop.f32.mrf.mxu0
  %v709 = vadd.f32 %v97, %v708
  %710 = vmatprep.mubr.bf16.mxu0 %v492
  %711 = vmatmul.mubr.bf16.gmra.mxu0 %v279
  %v712 = vpop.f32.mrf.mxu0
  %v713 = vadd.f32 %v93, %v712
  %v714 = vpop.f32.mrf.mxu0
  %v715 = vadd.f32 %v97, %v714
  %v716 = vpop.f32.mrf.mxu0
  %v717 = vadd.f32 %v93, %v716
  %v718 = vpop.f32.mrf.mxu0
  %v719 = vadd.f32 %v97, %v718
  %720 = vmatprep.mubr.bf16.mxu0 %v495
  %721 = vmatmul.mubr.bf16.gmra.mxu0 %v281
  %v722 = vpop.f32.mrf.mxu0
  %v723 = vadd.f32 %v93, %v722
  %v724 = vpop.f32.mrf.mxu0
  %v725 = vadd.f32 %v97, %v724
  %v726 = vpop.f32.mrf.mxu0
  %v727 = vadd.f32 %v93, %v726
  %v728 = vpop.f32.mrf.mxu0
  %v729 = vadd.f32 %v97, %v728
  %730 = vmatprep.mubr.bf16.mxu0 %v498
  %731 = vmatmul.mubr.bf16.gmra.mxu0 %v283
  %v732 = vpop.f32.mrf.mxu0
  %v733 = vadd.f32 %v93, %v732
  %v734 = vpop.f32.mrf.mxu0
  %v735 = vadd.f32 %v97, %v734
  %v736 = vpop.f32.mrf.mxu0
  %v737 = vadd.f32 %v93, %v736
  %v738 = vpop.f32.mrf.mxu0
  %v739 = vadd.f32 %v97, %v738
  %740 = vmatprep.mubr.bf16.mxu0 %v501
  %741 = vmatmul.mubr.bf16.gmra.mxu0 %v285
  %v742 = vpop.f32.mrf.mxu0
  %v743 = vadd.f32 %v93, %v742
  %v744 = vpop.f32.mrf.mxu0
  %v745 = vadd.f32 %v97, %v744
  %v746 = vpop.f32.mrf.mxu0
  %v747 = vadd.f32 %v93, %v746
  %v748 = vpop.f32.mrf.mxu0
  %v749 = vadd.f32 %v97, %v748
  %750 = vmatprep.mubr.bf16.mxu0 %v504
  %751 = vmatmul.mubr.bf16.gmra.mxu0 %v287
  %v752 = vpop.f32.mrf.mxu0
  %v753 = vadd.f32 %v93, %v752
  %v754 = vpop.f32.mrf.mxu0
  %v755 = vadd.f32 %v97, %v754
  %v756 = vpop.f32.mrf.mxu0
  %v757 = vadd.f32 %v93, %v756
  %v758 = vpop.f32.mrf.mxu0
  %v759 = vadd.f32 %v97, %v758
  %760 = vmatprep.mubr.bf16.mxu0 %v507
  %761 = vmatmul.mubr.bf16.gmra.mxu0 %v289
  %v762 = vpop.f32.mrf.mxu0
  %v763 = vadd.f32 %v93, %v762
  %v764 = vpop.f32.mrf.mxu0
  %v765 = vadd.f32 %v97, %v764
  %v766 = vpop.f32.mrf.mxu0
  %v767 = vadd.f32 %v93, %v766
  %v768 = vpop.f32.mrf.mxu0
  %v769 = vadd.f32 %v97, %v768
  %770 = vmatprep.mubr.bf16.mxu0 %v510
  %771 = vmatmul.mubr.bf16.gmra.mxu0 %v291
  %v772 = vpop.f32.mrf.mxu0
  %v773 = vadd.f32 %v93, %v772
  %v774 = vpop.f32.mrf.mxu0
  %v775 = vadd.f32 %v97, %v774
  %v776 = vpop.f32.mrf.mxu0
  %v777 = vadd.f32 %v93, %v776
  %v778 = vpop.f32.mrf.mxu0
  %v779 = vadd.f32 %v97, %v778
  %780 = vmatprep.mubr.bf16.mxu0 %v513
  %781 = vmatmul.mubr.bf16.gmra.mxu0 %v293
  %v782 = vpop.f32.mrf.mxu0
  %v783 = vadd.f32 %v93, %v782
  %v784 = vpop.f32.mrf.mxu0
  %v785 = vadd.f32 %v97, %v784
  %v786 = vpop.f32.mrf.mxu0
  %v787 = vadd.f32 %v93, %v786
  %v788 = vpop.f32.mrf.mxu0
  %v789 = vadd.f32 %v97, %v788
  %790 = vmatprep.mubr.bf16.mxu0 %v516
  %791 = vmatmul.mubr.bf16.gmra.mxu0 %v295
  %v792 = vpop.f32.mrf.mxu0
  %v793 = vadd.f32 %v93, %v792
  %v794 = vpop.f32.mrf.mxu0
  %v795 = vadd.f32 %v97, %v794
  %v796 = vpop.f32.mrf.mxu0
  %v797 = vpop.f32.mrf.mxu0
  %798 = vdwg.mxu0
  %799 = vst [vmem:[%s3] sm:$0xff] %v553
  %800 = vst [vmem:[%s3 + $0x8] sm:$0xff] %v555
  %801 = vst [vmem:[%s3 + $0x10] sm:$0xff] %v557
  %802 = vst [vmem:[%s3 + $0x18] sm:$0xff] %v559
  %803 = vst [vmem:[%s3 + $0x20] sm:$0xff] %v563
  %804 = vst [vmem:[%s3 + $0x28] sm:$0xff] %v565
  %805 = vst [vmem:[%s3 + $0x30] sm:$0xff] %v567
  %806 = vst [vmem:[%s3 + $0x38] sm:$0xff] %v569
  %807 = vst [vmem:[%s3 + $0x40] sm:$0xff] %v573
  %808 = vst [vmem:[%s3 + $0x48] sm:$0xff] %v575
  %809 = vst [vmem:[%s3 + $0x50] sm:$0xff] %v577
  %810 = vst [vmem:[%s3 + $0x58] sm:$0xff] %v579
  %811 = vst [vmem:[%s3 + $0x60] sm:$0xff] %v583
  %812 = vst [vmem:[%s3 + $0x68] sm:$0xff] %v585
  %813 = vst [vmem:[%s3 + $0x70] sm:$0xff] %v587
  %814 = vst [vmem:[%s3 + $0x78] sm:$0xff] %v589
  %815 = vst [vmem:[%s3 + $0x80] sm:$0xff] %v593
  %816 = vst [vmem:[%s3 + $0x88] sm:$0xff] %v595
  %817 = vst [vmem:[%s3 + $0x90] sm:$0xff] %v597
  %818 = vst [vmem:[%s3 + $0x98] sm:$0xff] %v599
  %819 = vst [vmem:[%s3 + $0xa0] sm:$0xff] %v603
  %820 = vst [vmem:[%s3 + $0xa8] sm:$0xff] %v605
  %821 = vst [vmem:[%s3 + $0xb0] sm:$0xff] %v607
  %822 = vst [vmem:[%s3 + $0xb8] sm:$0xff] %v609
  %823 = vst [vmem:[%s3 + $0xc0] sm:$0xff] %v613
  %824 = vst [vmem:[%s3 + $0xc8] sm:$0xff] %v615
  %825 = vst [vmem:[%s3 + $0xd0] sm:$0xff] %v617
  %826 = vst [vmem:[%s3 + $0xd8] sm:$0xff] %v619
  %827 = vst [vmem:[%s3 + $0xe0] sm:$0xff] %v623
  %828 = vst [vmem:[%s3 + $0xe8] sm:$0xff] %v625
  %829 = vst [vmem:[%s3 + $0xf0] sm:$0xff] %v627
  %830 = vst [vmem:[%s3 + $0xf8] sm:$0xff] %v629
  %831 = vst [vmem:[%s3 + $0x100] sm:$0xff] %v633
  %832 = vst [vmem:[%s3 + $0x108] sm:$0xff] %v635
  %833 = vst [vmem:[%s3 + $0x110] sm:$0xff] %v637
  %834 = vst [vmem:[%s3 + $0x118] sm:$0xff] %v639
  %835 = vst [vmem:[%s3 + $0x120] sm:$0xff] %v643
  %836 = vst [vmem:[%s3 + $0x128] sm:$0xff] %v645
  %837 = vst [vmem:[%s3 + $0x130] sm:$0xff] %v647
  %838 = vst [vmem:[%s3 + $0x138] sm:$0xff] %v649
  %839 = vst [vmem:[%s3 + $0x140] sm:$0xff] %v653
  %840 = vst [vmem:[%s3 + $0x148] sm:$0xff] %v655
  %841 = vst [vmem:[%s3 + $0x150] sm:$0xff] %v657
  %842 = vst [vmem:[%s3 + $0x158] sm:$0xff] %v659
  %843 = vst [vmem:[%s3 + $0x160] sm:$0xff] %v663
  %844 = vst [vmem:[%s3 + $0x168] sm:$0xff] %v665
  %845 = vst [vmem:[%s3 + $0x170] sm:$0xff] %v667
  %846 = vst [vmem:[%s3 + $0x178] sm:$0xff] %v669
  %847 = vst [vmem:[%s3 + $0x180] sm:$0xff] %v673
  %848 = vst [vmem:[%s3 + $0x188] sm:$0xff] %v675
  %849 = vst [vmem:[%s3 + $0x190] sm:$0xff] %v677
  %850 = vst [vmem:[%s3 + $0x198] sm:$0xff] %v679
  %851 = vst [vmem:[%s3 + $0x1a0] sm:$0xff] %v683
  %852 = vst [vmem:[%s3 + $0x1a8] sm:$0xff] %v685
  %853 = vst [vmem:[%s3 + $0x1b0] sm:$0xff] %v687
  %854 = vst [vmem:[%s3 + $0x1b8] sm:$0xff] %v689
  %855 = vst [vmem:[%s3 + $0x1c0] sm:$0xff] %v693
  %856 = vst [vmem:[%s3 + $0x1c8] sm:$0xff] %v695
  %857 = vst [vmem:[%s3 + $0x1d0] sm:$0xff] %v697
  %858 = vst [vmem:[%s3 + $0x1d8] sm:$0xff] %v699
  %859 = vst [vmem:[%s3 + $0x1e0] sm:$0xff] %v703
  %860 = vst [vmem:[%s3 + $0x1e8] sm:$0xff] %v705
  %861 = vst [vmem:[%s3 + $0x1f0] sm:$0xff] %v707
  %862 = vst [vmem:[%s3 + $0x1f8] sm:$0xff] %v709
  %863 = vst [vmem:[%s3 + $0x200] sm:$0xff] %v713
  %864 = vst [vmem:[%s3 + $0x208] sm:$0xff] %v715
  %865 = vst [vmem:[%s3 + $0x210] sm:$0xff] %v717
  %866 = vst [vmem:[%s3 + $0x218] sm:$0xff] %v719
  %867 = vst [vmem:[%s3 + $0x220] sm:$0xff] %v723
  %868 = vst [vmem:[%s3 + $0x228] sm:$0xff] %v725
  %869 = vst [vmem:[%s3 + $0x230] sm:$0xff] %v727
  %870 = vst [vmem:[%s3 + $0x238] sm:$0xff] %v729
  %871 = vst [vmem:[%s3 + $0x240] sm:$0xff] %v733
  %872 = vst [vmem:[%s3 + $0x248] sm:$0xff] %v735
  %873 = vst [vmem:[%s3 + $0x250] sm:$0xff] %v737
  %874 = vst [vmem:[%s3 + $0x258] sm:$0xff] %v739
  %875 = vst [vmem:[%s3 + $0x260] sm:$0xff] %v743
  %876 = vst [vmem:[%s3 + $0x268] sm:$0xff] %v745
  %877 = vst [vmem:[%s3 + $0x270] sm:$0xff] %v747
  %878 = vst [vmem:[%s3 + $0x278] sm:$0xff] %v749
  %879 = vst [vmem:[%s3 + $0x280] sm:$0xff] %v753
  %880 = vst [vmem:[%s3 + $0x288] sm:$0xff] %v755
  %881 = vst [vmem:[%s3 + $0x290] sm:$0xff] %v757
  %882 = vst [vmem:[%s3 + $0x298] sm:$0xff] %v759
  %883 = vst [vmem:[%s3 + $0x2a0] sm:$0xff] %v763
  %884 = vst [vmem:[%s3 + $0x2a8] sm:$0xff] %v765
  %885 = vst [vmem:[%s3 + $0x2b0] sm:$0xff] %v767
  %886 = vst [vmem:[%s3 + $0x2b8] sm:$0xff] %v769
  %887 = vst [vmem:[%s3 + $0x2c0] sm:$0xff] %v773
  %888 = vst [vmem:[%s3 + $0x2c8] sm:$0xff] %v775
  %889 = vst [vmem:[%s3 + $0x2d0] sm:$0xff] %v777
  %890 = vst [vmem:[%s3 + $0x2d8] sm:$0xff] %v779
  %891 = vst [vmem:[%s3 + $0x2e0] sm:$0xff] %v783
  %892 = vst [vmem:[%s3 + $0x2e8] sm:$0xff] %v785
  %893 = vst [vmem:[%s3 + $0x2f0] sm:$0xff] %v787
  %894 = vst [vmem:[%s3 + $0x2f8] sm:$0xff] %v789
  %895 = vst [vmem:[%s3 + $0x300] sm:$0xff] %v793
  %896 = vst [vmem:[%s3 + $0x308] sm:$0xff] %v795
  // Predicated region
  $region14: #{_lambda_.1} parent=0 // pred_check
    _
  $region15: #{_lambda_.1} parent=0 // pred_check_branch
    %898 = sbr.rel (0) target = $region17
  $region16: #{_lambda_.1} parent=0 // pred_region
    _
  $region17: #{_lambda_.1} parent=0 // pred_fallthru
    _
  // Predicated region
  $region18: #{_lambda_.1} parent=0 // pred_check
    _
  $region19: #{_lambda_.1} parent=0 // pred_check_branch
    %900 = sbr.rel (0) target = $region21
  $region20: #{_lambda_.1} parent=0 // pred_region
    _
  $region21: #{_lambda_.1} parent=0 // pred_fallthru
    _

</llo_original>
